<compile_context>
chip_gen: v7x
topology: tpu7x:2x2x1
jax: 0.10.0
libtpu: 0.0.40
codegen_flags: <defaults>
</compile_context>

<pallas_src>
import functools

import jax
import jax.numpy as jnp
from jax import lax
from jax.experimental import pallas as pl
from jax.experimental.pallas import tpu as pltpu


def _focal_loss_kernel(logits_ref, target_ref, out_ref, *,
                       gamma, ignore_index, n_total, block_rows):
    x = logits_ref[...].astype(jnp.float32)        # (TN, C), widened on the VPU
    t = target_ref[...]                            # (TN, 1) int32
    tn, c = x.shape

    # Mask rows past the true N (the last tile may be padded with garbage).
    row_ids = (pl.program_id(0) * block_rows
               + lax.broadcasted_iota(jnp.int32, (tn, 1), 0))
    in_bounds = row_ids < n_total

    # Single fused pass over the (TN, C) tile:
    #   shifted = x - rowmax(x)
    #   sum_exp = sum(exp(shifted))            -> lse       = m + log(sum_exp)
    #   tgt_sh  = shifted[target] (select+sum) -> tgt_logit = m + tgt_sh
    # so ce = lse - tgt_logit = log(sum_exp) - tgt_sh; the row max drops out
    # and only `shifted` stays live across both reductions (no second pass
    # over the widened x, no materialized f32 one-hot).
    m = jnp.max(x, axis=-1, keepdims=True)                          # (TN, 1)
    shifted = x - m                                                 # (TN, C)
    sum_exp = jnp.sum(jnp.exp(shifted), axis=-1, keepdims=True)     # (TN, 1)
    cls_ids = lax.broadcasted_iota(jnp.int32, (tn, c), 1)           # (TN, C)
    tgt_sh = jnp.sum(jnp.where(cls_ids == t, shifted, 0.0),
                     axis=-1, keepdims=True)                        # (TN, 1)

    ce = jnp.maximum(jnp.log(sum_exp) - tgt_sh, 0.0)   # clamp tiny rounding
    valid = jnp.logical_and(t != ignore_index, in_bounds)
    ce = jnp.where(valid, ce, 0.0)                     # ignored / padded -> 0

    pt = jnp.exp(-ce)
    base = 1.0 - pt                                    # in [0, 1) after clamp
    if gamma == 2.0:
        w = base * base                                # VPU mul, no EUP pow
    elif gamma == 1.0:
        w = base
    elif gamma == 0.0:
        w = jnp.ones_like(base)
    elif float(gamma).is_integer():
        w = lax.integer_pow(base, int(gamma))
    else:
        w = jnp.power(base, jnp.float32(gamma))        # safe: base >= 0

    partial = jnp.sum(w * ce)                          # scalar tile partial
    # Lane-dense, unmasked store of the tile partial (replicated over the
    # (8,128) block); the wrapper reads [:, 0, 0].
    out_ref[...] = jnp.full(out_ref.shape, partial, dtype=jnp.float32)


def _physical_vmem_bytes():
    """Per-TensorCore VMEM capacity; conservative (64 MiB) when unknown."""
    try:
        return int(pltpu.get_tpu_info().vmem_capacity_bytes)
    except Exception:
        pass
    try:
        kind = jax.devices()[0].device_kind.lower()
    except Exception:
        return 64 * 1024 * 1024
    # v4 / v5e / v5p / v6e TensorCores carry 128 MiB of VMEM; v7x has 64 MiB.
    if any(tag in kind for tag in ("v4", "v5", "v6")):
        return 128 * 1024 * 1024
    return 64 * 1024 * 1024


def focal_loss(logits, target, gamma=2.0, ignore_index=0, block_rows=None):
    """logits: (N, C) float32/bfloat16, target: (N,) int -> scalar float32."""
    n, c = logits.shape
    target2d = target.reshape(n, 1).astype(jnp.int32)
    in_itemsize = jnp.dtype(logits.dtype).itemsize

    # ---- VMEM-aware tile sizing (mem-streaming kernel; big double-buffered
    # DMAs are the whole game). Accounting uses the *compute* layout: lane
    # padding to 128 and the in-kernel f32 widen, not just the HBM itemsize.
    c_lanes = ((c + 127) // 128) * 128
    phys_vmem = _physical_vmem_bytes()
    vmem_limit = (phys_vmem * 3) // 4          # ~96 MiB v5e/v6e, ~48 MiB v7x
    n_padded = ((n + 7) // 8) * 8

    if block_rows is None:
        per_row = (2 * c_lanes * in_itemsize   # double-buffered logits tiles
                   + 2 * 128 * 4               # double-buffered lane-padded targets
                   + 3 * c_lanes * 4)          # live f32 temporaries in the kernel
        usable = int(vmem_limit * 0.8)         # headroom for compiler scratch
        block_rows = max(8, usable // per_row)
    block_rows = max(8, (int(block_rows) // 8) * 8)   # sublane multiple
    block_rows = min(block_rows, n_padded)

    num_tiles = (n + block_rows - 1) // block_rows

    kernel = functools.partial(
        _focal_loss_kernel, gamma=float(gamma), ignore_index=int(ignore_index),
        n_total=n, block_rows=block_rows)

    cost = pl.CostEstimate(
        flops=6 * n * c,
        transcendentals=n * c + 2 * n,
        bytes_accessed=n * c * in_itemsize + n * 4 + num_tiles * 8 * 128 * 4)

    partials = pl.pallas_call(
        kernel,
        out_shape=jax.ShapeDtypeStruct((num_tiles, 8, 128), jnp.float32),
        grid=(num_tiles,),
        in_specs=[
            pl.BlockSpec((block_rows, c), lambda i: (i, 0)),   # logits tile
            pl.BlockSpec((block_rows, 1), lambda i: (i, 0)),   # targets tile
        ],
        out_specs=pl.BlockSpec((1, 8, 128), lambda i: (i, 0, 0)),
        compiler_params=pltpu.CompilerParams(
            dimension_semantics=("parallel",),   # shards tiles across TCs (v7x)
            vmem_limit_bytes=int(vmem_limit)),
        cost_estimate=cost,
    )(logits, target2d)     # native dtype: no wrapper upcast (bf16 stays bf16)

    # Tiny final reduction in plain JAX; mean over the FULL N (padded/ignored
    # rows were already zeroed out of the numerator inside the kernel).
    return jnp.sum(partials[:, 0, 0]) / jnp.float32(n)


def _focal_loss_reference(logits, target, gamma=2.0, ignore_index=0):
    """Pure-JAX reference mirroring torch F.cross_entropy + focal weighting."""
    logp = jax.nn.log_softmax(logits.astype(jnp.float32), axis=-1)
    ce = -jnp.take_along_axis(logp, target[:, None].astype(jnp.int32), axis=-1)[:, 0]
    ce = jnp.where(target == ignore_index, 0.0, ce)
    pt = jnp.exp(-ce)
    return jnp.mean((1.0 - pt) ** gamma * ce)


if __name__ == "__main__":
    key = jax.random.PRNGKey(0)
    k1, k2 = jax.random.split(key)

    # Small shapes: N tokens (not a multiple of the small test tile -> exercises
    # padded-row masking and a multi-tile 'parallel' grid), C classes.
    N, C = 56, 32
    logits = jax.random.normal(k1, (N, C), dtype=jnp.float32)
    target = jax.random.randint(k2, (N,), 0, C, dtype=jnp.int32)
    target = target.at[0].set(0)   # make sure the ignore_index path is hit

    ref = _focal_loss_reference(logits, target, gamma=2.0, ignore_index=0)

    # f32 path, forced small tile (block_rows=16 -> 4 tiles, last one padded).
    out = focal_loss(logits, target, gamma=2.0, ignore_index=0, block_rows=16)
    out = jax.block_until_ready(out)
    assert jnp.allclose(out, ref, atol=1e-5, rtol=1e-5), (out, ref)

    # f32 path, auto (VMEM-budgeted) tile sizing -> single large tile here.
    out_auto = focal_loss(logits, target, gamma=2.0, ignore_index=0)
    out_auto = jax.block_until_ready(out_auto)
    assert jnp.allclose(out_auto, ref, atol=1e-5, rtol=1e-5), (out_auto, ref)

    # bf16 path: stream bf16 from HBM, widen inside the kernel.
    logits_bf16 = logits.astype(jnp.bfloat16)
    ref_bf = _focal_loss_reference(logits_bf16, target, gamma=2.0, ignore_index=0)
    out_bf = focal_loss(logits_bf16, target, gamma=2.0, ignore_index=0)
    out_bf = jax.block_until_ready(out_bf)
    assert jnp.allclose(out_bf, ref_bf, atol=1e-4, rtol=1e-4), (out_bf, ref_bf)

    print("KERNEL_OK")
</pallas_src>

<mosaic_0001>
module attributes {stable_mosaic.version = 11 : i64} {
  func.func @_focal_loss_kernel(%arg0: i32, %arg1: memref<16x32xf32, #tpu.memory_space<vmem>>, %arg2: memref<16x1xi32, #tpu.memory_space<vmem>>, %arg3: memref<1x8x128xf32, #tpu.memory_space<vmem>>) attributes {dimension_semantics = [#tpu.dimension_semantics<parallel>], iteration_bounds = array<i64: 4>, scalar_prefetch = 0 : i64, scratch_operands = 0 : i64, tpu.core_type = #tpu.core_type<tc>, window_params = [{transform_indices = @transform_0, window_bounds = array<i64: 16, 32>}, {transform_indices = @transform_1, window_bounds = array<i64: 16, 1>}, {transform_indices = @transform_2, window_bounds = array<i64: 1, 8, 128>}]} {
    %c0 = arith.constant 0 : index
    %c0_0 = arith.constant 0 : index
    %0 = vector.load %arg1[%c0, %c0_0] : memref<16x32xf32, #tpu.memory_space<vmem>>, vector<16x32xf32>
    %c0_1 = arith.constant 0 : index
    %c0_2 = arith.constant 0 : index
    %1 = vector.load %arg2[%c0_1, %c0_2] : memref<16x1xi32, #tpu.memory_space<vmem>>, vector<16x1xi32>
    %c16_i32 = arith.constant 16 : i32
    %2 = arith.muli %arg0, %c16_i32 : i32
    %3 = tpu.iota {dimensions = array<i32: 0>} : vector<16x1xi32>
    %4 = vector.broadcast %2 : i32 to vector<16x1xi32>
    %5 = arith.addi %4, %3 : vector<16x1xi32>
    %c56_i32 = arith.constant 56 : i32
    %6 = vector.broadcast %c56_i32 : i32 to vector<16x1xi32>
    %7 = arith.cmpi slt, %5, %6 : vector<16x1xi32>
    %cst = arith.constant dense<0xFF800000> : vector<16xf32>
    %8 = vector.multi_reduction <maximumf>, %0, %cst [1] : vector<16x32xf32> to vector<16xf32>
    %9 = vector.shape_cast %8 : vector<16xf32> to vector<16x1xf32>
    %10 = vector.broadcast %9 : vector<16x1xf32> to vector<16x32xf32>
    %11 = arith.subf %0, %10 : vector<16x32xf32>
    %12 = math.exp %11 : vector<16x32xf32>
    %cst_3 = arith.constant dense<0.000000e+00> : vector<16xf32>
    %13 = vector.multi_reduction <add>, %12, %cst_3 [1] : vector<16x32xf32> to vector<16xf32>
    %14 = vector.shape_cast %13 : vector<16xf32> to vector<16x1xf32>
    %15 = tpu.iota {dimensions = array<i32: 1>} : vector<16x32xi32>
    %16 = vector.broadcast %1 : vector<16x1xi32> to vector<16x32xi32>
    %17 = arith.cmpi eq, %15, %16 : vector<16x32xi32>
    %cst_4 = arith.constant 0.000000e+00 : f32
    %18 = vector.broadcast %cst_4 : f32 to vector<16x32xf32>
    %19 = arith.select %17, %11, %18 : vector<16x32xi1>, vector<16x32xf32>
    %cst_5 = arith.constant dense<0.000000e+00> : vector<16xf32>
    %20 = vector.multi_reduction <add>, %19, %cst_5 [1] : vector<16x32xf32> to vector<16xf32>
    %21 = vector.shape_cast %20 : vector<16xf32> to vector<16x1xf32>
    %22 = math.log %14 : vector<16x1xf32>
    %23 = arith.subf %22, %21 : vector<16x1xf32>
    %cst_6 = arith.constant 0.000000e+00 : f32
    %24 = vector.broadcast %cst_6 : f32 to vector<16x1xf32>
    %25 = arith.maximumf %23, %24 : vector<16x1xf32>
    %c0_i32 = arith.constant 0 : i32
    %26 = vector.broadcast %c0_i32 : i32 to vector<16x1xi32>
    %27 = arith.cmpi ne, %1, %26 : vector<16x1xi32>
    %28 = arith.andi %27, %7 : vector<16x1xi1>
    %cst_7 = arith.constant 0.000000e+00 : f32
    %29 = vector.broadcast %cst_7 : f32 to vector<16x1xf32>
    %30 = arith.select %28, %25, %29 : vector<16x1xi1>, vector<16x1xf32>
    %cst_8 = arith.constant 0.000000e+00 : f32
    %31 = vector.broadcast %cst_8 : f32 to vector<16x1xf32>
    %32 = arith.subf %31, %30 : vector<16x1xf32>
    %33 = math.exp %32 : vector<16x1xf32>
    %cst_9 = arith.constant 1.000000e+00 : f32
    %34 = vector.broadcast %cst_9 : f32 to vector<16x1xf32>
    %35 = arith.subf %34, %33 : vector<16x1xf32>
    %36 = arith.mulf %35, %35 : vector<16x1xf32>
    %37 = arith.mulf %36, %30 : vector<16x1xf32>
    %38 = vector.shape_cast %37 : vector<16x1xf32> to vector<1x16x1xf32>
    %cst_10 = arith.constant dense<0.000000e+00> : vector<1xf32>
    %39 = vector.multi_reduction <add>, %38, %cst_10 [1, 2] : vector<1x16x1xf32> to vector<1xf32>
    %40 = vector.shape_cast %39 : vector<1xf32> to vector<1x1x1xf32>
    %41 = vector.extract %40[0, 0, 0] : f32 from vector<1x1x1xf32>
    %42 = vector.broadcast %41 : f32 to vector<1x8x128xf32>
    %c0_11 = arith.constant 0 : index
    %c0_12 = arith.constant 0 : index
    %c0_13 = arith.constant 0 : index
    %43 = vector.load %arg3[%c0_11, %c0_12, %c0_13] : memref<1x8x128xf32, #tpu.memory_space<vmem>>, vector<1x8x128xf32>
    tpu.vector_store %arg3[%c0_11, %c0_12, %c0_13], %42 {strides = array<i32>} : memref<1x8x128xf32, #tpu.memory_space<vmem>>, vector<1x8x128xf32>,
    return
  }
  func.func @transform_0(%arg0: i32) -> (i32, i32) {
    %c0_i32 = arith.constant 0 : i32
    %c0_i32_0 = arith.constant 0 : i32
    return %arg0, %c0_i32 : i32, i32
  }
  func.func @transform_1(%arg0: i32) -> (i32, i32) {
    %c0_i32 = arith.constant 0 : i32
    %c0_i32_0 = arith.constant 0 : i32
    return %arg0, %c0_i32 : i32, i32
  }
  func.func @transform_2(%arg0: i32) -> (i32, i32, i32) {
    %c0_i32 = arith.constant 0 : i32
    %c0_i32_0 = arith.constant 0 : i32
    %c0_i32_1 = arith.constant 0 : i32
    return %arg0, %c0_i32, %c0_i32_0 : i32, i32, i32
  }
}

</mosaic_0001>

<llo_original>
// kernel: tpu_custom_call.1
$region0: #{tpu_custom_call.1}
  #allocation0 [shape = 'u32[]', space=smem, size = 0x4, offset = 0x4, fixed_abs, tag = 'smem constant byte address 0x4 - core index']
  #allocation1 [shape = 'u32[144,128]{1,0:T(1,128)}', space=vmem, size = 0x12000, scoped, tag = 'internal scratch']
  %s0 = inlined_call_operand.vmem [shape: f32[56,32], index: 0, kind: input, shape index: {}]
  %s1 = inlined_call_operand.vmem [shape: s32[56,1], index: 1, kind: input, shape index: {}]
  %s2 = inlined_call_operand.hbm [shape: f32[4,8,128], index: 2, kind: output, shape index: {}]
  %s3 = sld [smem:[#allocation0]]
  $region41: #{tpu_custom_call.1} parent=0
    _
  %s5 = ssub.s32 1, %s3
  %s6 = scalar_select 0, %s5, %s3
  $region1: #{tpu_custom_call.1} parent=0
    #allocation2 [shape = 'u8[8192]{0}', space=vmem, size = 0x2000, scoped, tag = 'output window, operand 0']
    #allocation3 [shape = 's32[2]{0}', space=sflag, size = 0x8, scoped, tag = 'scoped memory for tpu_custom_call.1']
    %7 = vsyncpa [#allocation3], 0
    %s8 = scalar_lea.sflag [#allocation3], 1
    %9 = vsyncpa %s8, 0
    loop: start=0, step=1, limit=6
    $region2: #{tpu_custom_call.1} parent=1 // loop_pre_header
      _
    $region3: #{tpu_custom_call.1} parent=1 // loop_header
      %s11 = sphi 0, %s15
      %p12 = scmp.ge.s32.totalorder %s11, 6
      %s21 = sphi 0, %s23
      %s24 = sphi 0, %s21
      %s25 = sphi 0, %s24
      %s41 = sphi 0, %s25
      %s47 = sphi 0, %s49
      %s50 = sphi 0, %s47
      %s51 = sphi 0, %s50
      %s67 = sphi 0, %s51
      %s73 = sphi 0, %s75
      %s76 = sphi 0, %s73
      %s77 = sphi 0, %s76
      %s93 = sphi 0, %s77
    $region4: #{tpu_custom_call.1} parent=1 // loop_header_branch
      %14 = sbr.rel (%p12) target = $region8
    $region5: #{tpu_custom_call.1} parent=1 // loop_body
      %s16 = ssub.s32 %s11, 1
      %s17 = ssub.s32 %s11, 2
      %s18 = sadd.s32 %s11, 1
      %s19 = ssub.s32 %s11, %s18
      %p20 = scmp.eq.s32.totalorder %s19, 0
      %s22 = sadd.s32 %s21, 1
      %s23 = scalar_select %p20, %s21, %s22
      %p26 = pneg %p20
      %p27 = scmp.eq.s32.totalorder %s11, 3
      %p28 = por %p26, %p27
      %p29 = scmp.ne.s32.totalorder %s21, %s24
      %p30 = scmp.eq.s32.totalorder %s11, 0
      %p31 = por %p29, %p30
      %p32 = scmp.ne.s32.totalorder %s21, %s24
      %p33 = scmp.eq.s32.totalorder %s16, 3
      %p34 = por %p32, %p33
      %p35 = scmp.ne.s32.totalorder %s24, %s25
      %p36 = scmp.eq.s32.totalorder %s16, 0
      %p37 = por %p35, %p36
      %p38 = scmp.ne.s32.totalorder %s24, %s25
      %p39 = scmp.eq.s32.totalorder %s17, 3
      %p40 = por %p38, %p39
      %p42 = scmp.ne.s32.totalorder %s25, %s41
      %p43 = scmp.eq.s32.totalorder %s17, 0
      %p44 = por %p42, %p43
      %s45 = ssub.s32 %s11, %s18
      %p46 = scmp.eq.s32.totalorder %s45, 0
      %s48 = sadd.s32 %s47, 1
      %s49 = scalar_select %p46, %s47, %s48
      %p52 = pneg %p46
      %p53 = scmp.eq.s32.totalorder %s11, 3
      %p54 = por %p52, %p53
      %p55 = scmp.ne.s32.totalorder %s47, %s50
      %p56 = scmp.eq.s32.totalorder %s11, 0
      %p57 = por %p55, %p56
      %p58 = scmp.ne.s32.totalorder %s47, %s50
      %p59 = scmp.eq.s32.totalorder %s16, 3
      %p60 = por %p58, %p59
      %p61 = scmp.ne.s32.totalorder %s50, %s51
      %p62 = scmp.eq.s32.totalorder %s16, 0
      %p63 = por %p61, %p62
      %p64 = scmp.ne.s32.totalorder %s50, %s51
      %p65 = scmp.eq.s32.totalorder %s17, 3
      %p66 = por %p64, %p65
      %p68 = scmp.ne.s32.totalorder %s51, %s67
      %p69 = scmp.eq.s32.totalorder %s17, 0
      %p70 = por %p68, %p69
      %s71 = ssub.s32 %s11, %s18
      %p72 = scmp.eq.s32.totalorder %s71, 0
      %s74 = sadd.s32 %s73, 1
      %s75 = scalar_select %p72, %s73, %s74
      %p78 = pneg %p72
      %p79 = scmp.eq.s32.totalorder %s11, 3
      %p80 = por %p78, %p79
      %p81 = scmp.ne.s32.totalorder %s73, %s76
      %p82 = scmp.eq.s32.totalorder %s11, 0
      %p83 = por %p81, %p82
      %p84 = scmp.ne.s32.totalorder %s73, %s76
      %p85 = scmp.eq.s32.totalorder %s16, 3
      %p86 = por %p84, %p85
      %p87 = scmp.ne.s32.totalorder %s76, %s77
      %p88 = scmp.eq.s32.totalorder %s16, 0
      %p89 = por %p87, %p88
      %p90 = scmp.ne.s32.totalorder %s76, %s77
      %p91 = scmp.eq.s32.totalorder %s17, 3
      %p92 = por %p90, %p91
      %p94 = scmp.ne.s32.totalorder %s77, %s93
      %p95 = scmp.eq.s32.totalorder %s17, 0
      %p96 = por %p94, %p95
      %p97 = scmp.le.s32.totalorder 1, %s11
      %p98 = scmp.lt.s32.totalorder %s11, 5
      %p99 = pnand %p97, %p98
      %p100 = pneg %p99
      // Predicated region
      $region9: #{tpu_custom_call.1} parent=5 // pred_check
        _
      $region10: #{tpu_custom_call.1} parent=5 // pred_check_branch
        %102 = sbr.rel (%p99) target = $region12
      $region11: #{tpu_custom_call.1} parent=5 // pred_region
        %s103 = ssub.s32 %s11, 1
      $region12: #{tpu_custom_call.1} parent=5 // pred_fallthru
        _
      %p104 = scmp.lt.s32.totalorder %s11, 4
      // Predicated region
      $region13: #{tpu_custom_call.1} parent=5 // pred_check
        %p105 = pneg %p104
      $region14: #{tpu_custom_call.1} parent=5 // pred_check_branch
        %107 = sbr.rel (%p105) target = $region16
      $region15: #{tpu_custom_call.1} parent=5 // pred_region
        // Predicated region
        $region17: #{tpu_custom_call.1} parent=15 // pred_check
          %p108 = pneg %p31
        $region18: #{tpu_custom_call.1} parent=15 // pred_check_branch
          %110 = sbr.rel (%p108) target = $region20
        $region19: #{tpu_custom_call.1} parent=15 // pred_region
          %s111 = smul.u32 2, %s11
          %s112 = ssub.s32 7, %s111
          %p113 = scmp.lt.s32.totalorder %s112, 2
          %s114 = scalar_select %p113, %s112, 2
          %s115 = smul.u32 128, %s114
          %p116 = scmp.lt.s32.totalorder %s111, 6
          %s117 = scalar_select %p116, %s111, 6
          %s118 = smul.addr %s117, 8
          %s119 = scalar_lea.vmem %s0, %s118
          %s120 = smul.u32 2, %s11
          %s121 = ssub.s32 7, %s120
          %p122 = scmp.lt.s32.totalorder %s121, 2
          %s123 = scalar_select %p122, %s121, 2
          %s124 = smul.u32 128, %s123
        $region20: #{tpu_custom_call.1} parent=15 // pred_fallthru
          _
        // Predicated region
        $region21: #{tpu_custom_call.1} parent=15 // pred_check
          %p125 = pneg %p57
        $region22: #{tpu_custom_call.1} parent=15 // pred_check_branch
          %127 = sbr.rel (%p125) target = $region24
        $region23: #{tpu_custom_call.1} parent=15 // pred_region
          %s128 = smul.u32 2, %s11
          %s129 = ssub.s32 7, %s128
          %p130 = scmp.lt.s32.totalorder %s129, 2
          %s131 = scalar_select %p130, %s129, 2
          %s132 = smul.u32 128, %s131
          %p133 = scmp.lt.s32.totalorder %s128, 6
          %s134 = scalar_select %p133, %s128, 6
          %s135 = smul.addr %s134, 8
          %s136 = scalar_lea.vmem %s1, %s135
          %s137 = smul.u32 2, %s11
          %s138 = ssub.s32 7, %s137
          %p139 = scmp.lt.s32.totalorder %s138, 2
          %s140 = scalar_select %p139, %s138, 2
          %s141 = smul.u32 128, %s140
        $region24: #{tpu_custom_call.1} parent=15 // pred_fallthru
          _
      $region16: #{tpu_custom_call.1} parent=5 // pred_fallthru
        _
      %p142 = scmp.le.s32.totalorder 1, %s11
      %p143 = scmp.lt.s32.totalorder %s11, 5
      %p144 = pnand %p142, %p143
      %p145 = pneg %p144
      // Predicated region
      $region25: #{tpu_custom_call.1} parent=5 // pred_check
        _
      $region26: #{tpu_custom_call.1} parent=5 // pred_check_branch
        %147 = sbr.rel (%p144) target = $region28
      $region27: #{tpu_custom_call.1} parent=5 // pred_region
        %s148 = ssub.s32 %s11, 1
        %s149 = smul.u32 2, %s16
        %s150 = ssub.s32 7, %s149
        %p151 = scmp.lt.s32.totalorder %s150, 2
        %s152 = scalar_select %p151, %s150, 2
        %s153 = smul.u32 128, %s152
        %p154 = scmp.lt.s32.totalorder %s149, 6
        %s155 = scalar_select %p154, %s149, 6
        %s156 = smul.addr %s155, 8
        %s157 = scalar_lea.vmem %s0, %s156
        %p158 = pneg %p37
        %p159 = pneg %p34
        %s160 = smul.u32 2, %s16
        %s161 = ssub.s32 7, %s160
        %p162 = scmp.lt.s32.totalorder %s161, 2
        %s163 = scalar_select %p162, %s161, 2
        %s164 = smul.u32 128, %s163
        %p165 = scmp.lt.s32.totalorder %s160, 6
        %s166 = scalar_select %p165, %s160, 6
        %s167 = smul.addr %s166, 8
        %s168 = scalar_lea.vmem %s1, %s167
        %p169 = pneg %p63
        %p170 = pneg %p60
        %p171 = pneg %p89
        %p172 = pneg %p86
        %s173 = sand.u32 %s76, 1
        %s174 = scalar_lea.sflag [#allocation3], %s173
        %s175 = sand.u32 %s76, 1
        %s176 = smul.addr %s175, 8
        %s177 = scalar_lea.vmem [#allocation2], %s176
        %s178 = smul.u32 2, %s16
        %s179 = ssub.s32 7, %s178
        %p180 = scmp.lt.s32.totalorder %s179, 2
        %s181 = scalar_select %p180, %s179, 2
        %s182 = smul.u32 128, %s181
        %p183 = scmp.lt.s32.totalorder %s178, 6
        %s184 = scalar_select %p183, %s178, 6
        %s185 = smul.addr %s184, 8
        %s186 = scalar_lea.vmem %s0, %s185
        %s187 = smul.u32 2, %s16
        %s188 = ssub.s32 7, %s187
        %p189 = scmp.lt.s32.totalorder %s188, 2
        %s190 = scalar_select %p189, %s188, 2
        %s191 = smul.u32 128, %s190
        %s192 = smul.u32 2, %s16
        %s193 = ssub.s32 7, %s192
        %p194 = scmp.lt.s32.totalorder %s193, 2
        %s195 = scalar_select %p194, %s193, 2
        %s196 = smul.u32 128, %s195
        %p197 = scmp.lt.s32.totalorder %s192, 6
        %s198 = scalar_select %p197, %s192, 6
        %s199 = smul.addr %s198, 8
        %s200 = scalar_lea.vmem %s1, %s199
        %s201 = smul.u32 2, %s16
        %s202 = ssub.s32 7, %s201
        %p203 = scmp.lt.s32.totalorder %s202, 2
        %s204 = scalar_select %p203, %s202, 2
        %s205 = smul.u32 128, %s204
        %v206 = vld [vmem:[%s186] sm:$0xff]
        %v207 = vld [vmem:[%s186 + $0x8] sm:$0xff]
        %v208 = vld [vmem:[%s200] sm:$0xff]
        %v209 = vld [vmem:[%s200 + $0x8] sm:$0xff]
        %s210 = smul.u32 %s16, 16
        %v211 = vlaneseq
        %v212 = vshrl.u32 %v211, 7
        %v213 = vadd.s32 %v212, 8
        %v214 = vstv %s210
        %v215 = vadd.s32 %v214, %v212
        %v216 = vadd.s32 %v214, %v213
        %vm217 = vcmp.lt.s32.totalorder %v215, 56
        %vm218 = vcmp.lt.s32.totalorder %v216, 56
        %vm219 = vcmask 261120
        %v220 = vsel %vm219, %v206, -inf
        %221 = vmax.xlane.f32.xlu0 %v220
        %v222 = vpop.xlane.xlu0 %221
        %v223 = vsel %vm219, %v207, -inf
        %224 = vmax.xlane.f32.xlu0 %v223
        %v225 = vpop.xlane.xlu0 %224
        %v226 = vsub.f32 %v206, %v222
        %v227 = vsub.f32 %v207, %v225
        %v228 = vmul.f32 %v226, 1.442695
        %v229 = vpow.pop %v228
        %v230 = vmul.f32 %v227, 1.442695
        %v231 = vpow.pop %v230
        %v232 = vsel %vm219, %v229, 0.0
        %233 = vadd.xlane.f32.xlu0 %v232
        %v234 = vpop.xlane.xlu0 %233
        %v235 = vsel %vm219, %v231, 0.0
        %236 = vadd.xlane.f32.xlu0 %v235
        %v237 = vpop.xlane.xlu0 %236
        %v238 = vlaneseq
        %v239 = vand.u32 %v238, 127
        %240 = vset.pattern.permute.xlu0 0
        %241 = vperm.xlu0 %240, %v208
        %v242 = vpop.permute.xlu0 %241
        %243 = vset.pattern.permute.xlu0 0
        %244 = vperm.xlu0 %243, %v209
        %v245 = vpop.permute.xlu0 %244
        %vm246 = vcmp.eq.s32.totalorder %v239, %v242
        %vm247 = vcmp.eq.s32.totalorder %v239, %v245
        %v248 = vsel %vm246, %v226, 0.0
        %v249 = vsel %vm247, %v227, 0.0
        %v250 = vsel %vm219, %v248, 0.0
        %251 = vadd.xlane.f32.xlu0 %v250
        %v252 = vpop.xlane.xlu0 %251
        %v253 = vsel %vm219, %v249, 0.0
        %254 = vadd.xlane.f32.xlu0 %v253
        %v255 = vpop.xlane.xlu0 %254
        %v256 = vlog2.pop %v234
        %v257 = vmul.f32 %v256, 0.6931472
        %v258 = vlog2.pop %v237
        %v259 = vmul.f32 %v258, 0.6931472
        %v260 = vsub.f32 %v257, %v252
        %v261 = vsub.f32 %v259, %v255
        %v262 = vmax.f32 %v260, 0.0
        %v263 = vmax.f32 %v261, 0.0
        %vm264 = vcmp.ne.s32.totalorder %v208, 0
        %vm265 = vcmp.ne.s32.totalorder %v209, 0
        %vm266 = vmand %vm264, %vm217
        %vm267 = vmand %vm265, %vm218
        %v268 = vsel %vm266, %v262, 0.0
        %v269 = vsel %vm267, %v263, 0.0
        %v270 = vsub.f32 0.0, %v268
        %v271 = vsub.f32 0.0, %v269
        %v272 = vmul.f32 %v270, 1.442695
        %v273 = vpow.pop %v272
        %v274 = vmul.f32 %v271, 1.442695
        %v275 = vpow.pop %v274
        %v276 = vsub.f32 1.0, %v273
        %v277 = vsub.f32 1.0, %v275
        %v278 = vmul.f32 %v276, %v276
        %v279 = vmul.f32 %v277, %v277
        %v280 = vmul.f32 %v278, %v268
        %v281 = vmul.f32 %v279, %v269
        %vm282 = vcmask 7168
        %v283 = vsel %vm282, %v280, 0.0
        %v284 = vsel %vm282, %v281, 0.0
        %v285 = vadd.f32 %v283, %v284
        %286 = vadd.xlane.f32.xlu0 %v285
        %v287 = vpop.xlane.xlu0 %286
        %v288 = vrot.slane %v287, 4
        %v289 = vadd.f32 %v287, %v288
        %v290 = vrot.slane %v289, 2
        %v291 = vadd.f32 %v289, %v290
        %v292 = vrot.slane %v291, 1
        %v293 = vadd.f32 %v291, %v292
        %s294 = vtos %v293
        %v295 = vstv %s294
        %296 = vst [vmem:[%s177] sm:$0xff] %v295
        %s297 = sand.u32 %s76, 1
        %s298 = scalar_lea.sflag [#allocation3], %s297
        %s299 = sand.u32 %s76, 1
        %s300 = smul.addr %s299, 8
        %s301 = scalar_lea.vmem [#allocation2], %s300
        // Predicated region
        $region29: #{tpu_custom_call.1} parent=27 // pred_check
          %p302 = pneg %p86
        $region30: #{tpu_custom_call.1} parent=27 // pred_check_branch
          %304 = sbr.rel (%p302) target = $region32
        $region31: #{tpu_custom_call.1} parent=27 // pred_region
          %s306 = ssub.s32 128, 128
          %307 = vsyncadd %s298, %s306
          %s308 = smul.addr %s16, 128
          %s309 = scalar_lea.hbm %s2, %s308
          %s311 = sshll.u32 %s301, 4
          %s312 = int_to_ptr.vmem [resolvable:$true] %s311
          %314 = dma.vmem_to_hbm [thread:$0]  %s312, 128, %s309, %s298
        $region32: #{tpu_custom_call.1} parent=27 // pred_fallthru
          _
      $region28: #{tpu_custom_call.1} parent=5 // pred_fallthru
        _
      %p315 = scmp.le.s32.totalorder 2, %s11
      // Predicated region
      $region33: #{tpu_custom_call.1} parent=5 // pred_check
        %p316 = pneg %p315
      $region34: #{tpu_custom_call.1} parent=5 // pred_check_branch
        %318 = sbr.rel (%p316) target = $region36
      $region35: #{tpu_custom_call.1} parent=5 // pred_region
        %s319 = ssub.s32 %s11, 2
        // Predicated region
        $region37: #{tpu_custom_call.1} parent=35 // pred_check
          %p320 = pneg %p92
        $region38: #{tpu_custom_call.1} parent=35 // pred_check_branch
          %322 = sbr.rel (%p320) target = $region40
        $region39: #{tpu_custom_call.1} parent=35 // pred_region
          %s323 = sand.u32 %s77, 1
          %s324 = scalar_lea.sflag [#allocation3], %s323
          %s325 = sand.u32 %s77, 1
          %s326 = smul.addr %s325, 8
          %s327 = scalar_lea.vmem [#allocation2], %s326
          %328 = dma.done %s324, 128
        $region40: #{tpu_custom_call.1} parent=35 // pred_fallthru
          _
      $region36: #{tpu_custom_call.1} parent=5 // pred_fallthru
        _
    $region6: #{tpu_custom_call.1} parent=1 // loop_footer
      %s15 = sadd.s32 1, %s11
    $region7: #{tpu_custom_call.1} parent=1 // loop_footer_branch
      %10 = sbr.rel target = $region3
    $region8: #{tpu_custom_call.1} parent=1 // loop_exit
      _
    %329 = vsyncpa [#allocation3], 1
    %s330 = scalar_lea.sflag [#allocation3], 1
    %331 = vsyncpa %s330, 1

</llo_original>
